<compile_context>
chip_gen: v5e
topology: v5e:2x2
jax: 0.10.0
libtpu: 0.0.40
codegen_flags: <defaults>
</compile_context>

<pallas_src>
import functools

import jax
import jax.numpy as jnp
from jax.experimental import pallas as pl
from jax.experimental.pallas import tpu as pltpu

LANE = 128      # feature dims padded to multiples of this (lane-dense blocks / MXU tiles)
ROW_TILE = 16   # bf16 packs 16 rows per vreg; batch tiles are multiples of this


def _round_up(x, m):
    return ((x + m - 1) // m) * m


def _cdiv(a, b):
    return -(-a // b)


# ---------------------------------------------------------------------------
# Fused kernel: x -> [Linear + LeakyReLU]*(n-1) -> Linear -> sigmoid
# refs = (x_ref, w0, b0, w1, b1, ..., w_{n-1}, b_{n-1}, o_ref)
#   x_ref : (TM, K)          input tile, original dtype (cast to bf16 in-kernel)
#   w_l   : (Kl, Nl_pad)     bf16 pre-transposed, zero-padded weight (VMEM-resident)
#   b_l   : (1, Nl_pad)      f32 zero-padded bias (VMEM-resident)
#   o_ref : (TM, N_pad)      bf16 sigmoid output tile (lane-dense, 128-wide)
# ---------------------------------------------------------------------------
def _fused_mlp_disc_kernel(*refs, n_layers, slope, compute_dtype):
    x_ref = refs[0]
    o_ref = refs[-1]
    wb = refs[1:-1]

    h = x_ref[...].astype(compute_dtype)     # stays in VMEM/vregs for all layers
    for li in range(n_layers):
        w = wb[2 * li][...]                   # bf16 (K, N_pad)
        b = wb[2 * li + 1][...]               # f32  (1, N_pad)
        # MXU matmul with f32 accumulation; bias add / activation in f32.
        y = jnp.dot(h, w, preferred_element_type=jnp.float32) + b
        if li < n_layers - 1:
            y = jnp.where(y >= 0.0, y, slope * y)      # LeakyReLU(0.2)
            h = y.astype(compute_dtype)
        else:
            # MLPDiscriminator applies torch.sigmoid to the MLP output.
            o_ref[...] = jax.nn.sigmoid(y).astype(o_ref.dtype)


# ---------------------------------------------------------------------------
# Parameter init (PyTorch nn.Linear shapes/init) and one-time preparation.
# ---------------------------------------------------------------------------
def init_discriminator_params(key, latent_dim, n_hidden, hidden_size, data_dim):
    """Returns [(W, b), ...] with PyTorch shapes: W (out, in), b (out,)."""
    sizes = []
    in_sz = latent_dim
    for _ in range(n_hidden):
        sizes.append((in_sz, hidden_size))
        in_sz = hidden_size
    sizes.append((in_sz, data_dim))

    params = []
    for fan_in, fan_out in sizes:
        key, kw, kb = jax.random.split(key, 3)
        bound = float(fan_in) ** -0.5
        W = jax.random.uniform(kw, (fan_out, fan_in), jnp.float32, -bound, bound)
        b = jax.random.uniform(kb, (fan_out,), jnp.float32, -bound, bound)
        params.append((W, b))
    return params


def prepare_params(params, compute_dtype=jnp.bfloat16):
    """One-time prep: transpose to (in, out), pad OUTPUT feature dims to 128, cast to bf16.

    The first layer's input dim stays unpadded (it must match the raw x width); later
    layers' input dims equal the previous layer's padded output dim.  Zero padding is
    exact: padded activation columns are produced with zero weights + zero bias, stay
    exactly 0 through LeakyReLU, and hit zero weight rows in the next layer.
    """
    prepared = []
    prev_out_pad = None
    for li, (W, b) in enumerate(params):
        fan_out, fan_in = W.shape
        in_dim = fan_in if li == 0 else prev_out_pad
        out_pad = _round_up(fan_out, LANE)
        w_t = (
            jnp.zeros((in_dim, out_pad), compute_dtype)
            .at[:fan_in, :fan_out]
            .set(W.T.astype(compute_dtype))
        )
        b_p = jnp.zeros((1, out_pad), jnp.float32).at[0, :fan_out].set(b)
        prepared.append((w_t, b_p))
        prev_out_pad = out_pad
    return prepared


# ---------------------------------------------------------------------------
# Per-generation defaults (VMEM capacity detection with safe fallback).
# ---------------------------------------------------------------------------
@functools.lru_cache(maxsize=1)
def _vmem_capacity_bytes():
    try:
        cap = int(getattr(pltpu.get_tpu_info(), "vmem_capacity_bytes", 0))
        if cap > 0:
            return cap
    except Exception:
        pass
    return 64 * 1024 * 1024   # conservative (v7x-sized) fallback


def _default_tm():
    # v7x (<=64 MiB VMEM per core): smaller tiles; v5e/v6e (128 MiB): bigger tiles
    # to amortize the ~0.35us/step pipeline overhead.
    return 256 if _vmem_capacity_bytes() <= 64 * 1024 * 1024 else 512


def _pick_tm(M, tm_max):
    """Batch tile: multiple of 16 rows, >=2 grid steps when the batch allows,
    never larger than the array (tiny batches use one exact full-array tile)."""
    full = (M // ROW_TILE) * ROW_TILE
    if full < ROW_TILE:
        return M                                   # block == full dims -> exempt
    tm = _round_up(_cdiv(M, 2), ROW_TILE)          # aim for >=2 steps (v7x: 2 TCs)
    return max(ROW_TILE, min(tm, tm_max, full))


# ---------------------------------------------------------------------------
# Forward wrapper: fused kernel over a 1-D parallel batch grid.
# ---------------------------------------------------------------------------
@functools.partial(jax.jit, static_argnames=("out_dim", "tm", "single_buffer_weights"))
def _forward_impl(prepared, x, *, out_dim, tm, single_buffer_weights):
    M, K = x.shape
    n_layers = len(prepared)
    assert prepared[0][0].shape[0] == K, "first-layer weight must match latent_dim"
    N_pad = prepared[-1][0].shape[1]
    cdtype = prepared[0][0].dtype

    TM = _pick_tm(M, tm)
    grid = (_cdiv(M, TM),)

    # x: unpadded; K block dim equals the full array dim (exempt from 128 rule).
    in_specs = [pl.BlockSpec((TM, K), lambda i: (i, 0))]
    flat_params = []
    for w_t, b_p in prepared:
        flat_params += [w_t, b_p]
        for arr in (w_t, b_p):
            if single_buffer_weights:
                # Constant index_map => VMEM-resident; single-buffered to halve
                # resident parameter VMEM (matters most on v7x's 64 MiB).
                in_specs.append(
                    pl.BlockSpec(arr.shape, lambda i: (0, 0),
                                 pipeline_mode=pl.Buffered(1)))
            else:
                in_specs.append(pl.BlockSpec(arr.shape, lambda i: (0, 0)))

    # VMEM budget: double-buffered x/out tiles + resident params, 2x headroom,
    # floored at 8 MiB and capped by the detected per-core capacity.
    buf = 1 if single_buffer_weights else 2
    need = (2 * TM * K * x.dtype.itemsize
            + 2 * TM * N_pad * jnp.dtype(jnp.bfloat16).itemsize
            + buf * sum(w.size * w.dtype.itemsize + b.size * b.dtype.itemsize
                        for w, b in prepared))
    cap = int(_vmem_capacity_bytes() * 0.78)
    vmem_limit = int(min(cap, max(8 * 1024 * 1024, 2 * need)))

    kernel = functools.partial(_fused_mlp_disc_kernel, n_layers=n_layers,
                               slope=0.2, compute_dtype=cdtype)

    out_p = pl.pallas_call(
        kernel,
        out_shape=jax.ShapeDtypeStruct((M, N_pad), jnp.bfloat16),
        grid=grid,
        in_specs=in_specs,
        out_specs=pl.BlockSpec((TM, N_pad), lambda i: (i, 0)),
        compiler_params=pltpu.CompilerParams(
            dimension_semantics=("parallel",),   # batch tiles shard across TCs (v7x)
            vmem_limit_bytes=vmem_limit,
        ),
    )(x, *flat_params)

    # Only a tiny column slice remains (no batch padding was added).
    return out_p[:, :out_dim]


def discriminator_forward(prepared, x, *, out_dim, tm=None):
    """Fused MLPDiscriminator forward. Returns bf16 sigmoid outputs (M, out_dim)."""
    if tm is None:
        tm = _default_tm()
    try:
        out = _forward_impl(prepared, x, out_dim=out_dim, tm=tm,
                            single_buffer_weights=True)
        return jax.block_until_ready(out)
    except Exception:
        # Older/alternate JAX without pipeline_mode / Buffered(1): fall back to the
        # default double-buffered resident-weight specs (identical semantics).
        out = _forward_impl(prepared, x, out_dim=out_dim, tm=tm,
                            single_buffer_weights=False)
        return jax.block_until_ready(out)


# ---------------------------------------------------------------------------
# Pure-JAX references for verification.
# ---------------------------------------------------------------------------
def discriminator_reference_f32(params, x):
    h = x
    n = len(params)
    for li, (W, b) in enumerate(params):
        h = h @ W.T + b
        if li != n - 1:
            h = jnp.where(h >= 0.0, h, 0.2 * h)
    return jax.nn.sigmoid(h)


def discriminator_reference_bf16(params, x):
    """Same bf16-matmul / f32-accumulate recipe as the kernel (output left in f32)."""
    h = x.astype(jnp.bfloat16)
    n = len(params)
    for li, (W, b) in enumerate(params):
        y = jnp.dot(h, W.T.astype(jnp.bfloat16), preferred_element_type=jnp.float32) + b
        if li != n - 1:
            y = jnp.where(y >= 0.0, y, 0.2 * y)
            h = y.astype(jnp.bfloat16)
        else:
            h = y
    return jax.nn.sigmoid(h)


if __name__ == "__main__":
    key = jax.random.PRNGKey(0)

    # Small shapes consistent with the module's forward: z is (batch, latent_dim).
    batch = 8
    latent_dim = 32
    n_hidden = 2
    hidden_size = 32
    data_dim = 16

    key, kx, kx2 = jax.random.split(key, 3)
    z = jax.random.normal(kx, (batch, latent_dim), jnp.float32)

    params = init_discriminator_params(key, latent_dim, n_hidden, hidden_size, data_dim)
    prepared = prepare_params(params)          # pad/transpose/cast ONCE, off the hot path

    out = discriminator_forward(prepared, z, out_dim=data_dim)
    out = jax.block_until_ready(out)
    assert out.shape == (batch, data_dim)

    out_f32 = out.astype(jnp.float32)
    ref_bf16 = discriminator_reference_bf16(params, z)
    ref_f32 = discriminator_reference_f32(params, z)
    # Matched-precision reference (bf16 matmul, f32 accumulate; extra slack for the
    # bf16 output store).
    assert jnp.allclose(out_f32, ref_bf16, atol=1e-2, rtol=2e-2), float(
        jnp.max(jnp.abs(out_f32 - ref_bf16)))
    # Full-f32 reference (bf16 weight/activation/output rounding).
    assert jnp.allclose(out_f32, ref_f32, atol=5e-2, rtol=5e-2), float(
        jnp.max(jnp.abs(out_f32 - ref_f32)))

    # Larger, non-tile-multiple batch: exercises the multi-step "parallel" grid and
    # the masked partial last tile (no wrapper-side padding of x).
    batch2 = 200
    z2 = jax.random.normal(kx2, (batch2, latent_dim), jnp.float32)
    out2 = jax.block_until_ready(discriminator_forward(prepared, z2, out_dim=data_dim))
    ref2 = discriminator_reference_bf16(params, z2)
    assert out2.shape == (batch2, data_dim)
    assert jnp.allclose(out2.astype(jnp.float32), ref2, atol=1e-2, rtol=2e-2), float(
        jnp.max(jnp.abs(out2.astype(jnp.float32) - ref2)))

    print("KERNEL_OK")
</pallas_src>

<mosaic_0001>
module attributes {stable_mosaic.version = 11 : i64} {
  func.func @_fused_mlp_disc_kernel(%arg0: i32, %arg1: memref<8x32xf32, #tpu.memory_space<vmem>>, %arg2: memref<32x128xbf16, #tpu.memory_space<vmem>>, %arg3: memref<1x128xf32, #tpu.memory_space<vmem>>, %arg4: memref<128x128xbf16, #tpu.memory_space<vmem>>, %arg5: memref<1x128xf32, #tpu.memory_space<vmem>>, %arg6: memref<128x128xbf16, #tpu.memory_space<vmem>>, %arg7: memref<1x128xf32, #tpu.memory_space<vmem>>, %arg8: memref<8x128xbf16, #tpu.memory_space<vmem>>) attributes {dimension_semantics = [#tpu.dimension_semantics<parallel>], iteration_bounds = array<i64: 1>, scalar_prefetch = 0 : i64, scratch_operands = 0 : i64, tpu.core_type = #tpu.core_type<tc>, window_params = [{transform_indices = @transform_0, window_bounds = array<i64: 8, 32>}, {pipeline_mode = #tpu.pipeline_mode<synchronous>, transform_indices = @transform_1, window_bounds = array<i64: 32, 128>}, {pipeline_mode = #tpu.pipeline_mode<synchronous>, transform_indices = @transform_2, window_bounds = array<i64: 1, 128>}, {pipeline_mode = #tpu.pipeline_mode<synchronous>, transform_indices = @transform_3, window_bounds = array<i64: 128, 128>}, {pipeline_mode = #tpu.pipeline_mode<synchronous>, transform_indices = @transform_4, window_bounds = array<i64: 1, 128>}, {pipeline_mode = #tpu.pipeline_mode<synchronous>, transform_indices = @transform_5, window_bounds = array<i64: 128, 128>}, {pipeline_mode = #tpu.pipeline_mode<synchronous>, transform_indices = @transform_6, window_bounds = array<i64: 1, 128>}, {transform_indices = @transform_7, window_bounds = array<i64: 8, 128>}]} {
    %c0 = arith.constant 0 : index
    %c0_0 = arith.constant 0 : index
    %0 = vector.load %arg1[%c0, %c0_0] : memref<8x32xf32, #tpu.memory_space<vmem>>, vector<8x32xf32>
    %1 = arith.truncf %0 : vector<8x32xf32> to vector<8x32xbf16>
    %c0_1 = arith.constant 0 : index
    %c0_2 = arith.constant 0 : index
    %2 = vector.load %arg2[%c0_1, %c0_2] : memref<32x128xbf16, #tpu.memory_space<vmem>>, vector<32x128xbf16>
    %c0_3 = arith.constant 0 : index
    %c0_4 = arith.constant 0 : index
    %3 = vector.load %arg3[%c0_3, %c0_4] : memref<1x128xf32, #tpu.memory_space<vmem>>, vector<1x128xf32>
    %cst = arith.constant dense<0.000000e+00> : vector<8x128xf32>
    %4 = tpu.matmul %1, %2, %cst {dimension_numbers = #tpu.dot_dimension_numbers<[1], [0], [0], [1], [0, 0, 1, 1], [], []>} : vector<8x32xbf16>, vector<32x128xbf16>, vector<8x128xf32> -> vector<8x128xf32>
    %5 = vector.broadcast %3 : vector<1x128xf32> to vector<8x128xf32>
    %6 = arith.addf %4, %5 : vector<8x128xf32>
    %cst_5 = arith.constant 0.000000e+00 : f32
    %7 = vector.broadcast %cst_5 : f32 to vector<8x128xf32>
    %8 = arith.cmpf oge, %6, %7 : vector<8x128xf32>
    %cst_6 = arith.constant 2.000000e-01 : f32
    %9 = vector.broadcast %cst_6 : f32 to vector<8x128xf32>
    %10 = arith.mulf %9, %6 : vector<8x128xf32>
    %11 = arith.select %8, %6, %10 : vector<8x128xi1>, vector<8x128xf32>
    %12 = arith.truncf %11 : vector<8x128xf32> to vector<8x128xbf16>
    %c0_7 = arith.constant 0 : index
    %c0_8 = arith.constant 0 : index
    %13 = vector.load %arg4[%c0_7, %c0_8] : memref<128x128xbf16, #tpu.memory_space<vmem>>, vector<128x128xbf16>
    %c0_9 = arith.constant 0 : index
    %c0_10 = arith.constant 0 : index
    %14 = vector.load %arg5[%c0_9, %c0_10] : memref<1x128xf32, #tpu.memory_space<vmem>>, vector<1x128xf32>
    %cst_11 = arith.constant dense<0.000000e+00> : vector<8x128xf32>
    %15 = tpu.matmul %12, %13, %cst_11 {dimension_numbers = #tpu.dot_dimension_numbers<[1], [0], [0], [1], [0, 0, 1, 1], [], []>} : vector<8x128xbf16>, vector<128x128xbf16>, vector<8x128xf32> -> vector<8x128xf32>
    %16 = vector.broadcast %14 : vector<1x128xf32> to vector<8x128xf32>
    %17 = arith.addf %15, %16 : vector<8x128xf32>
    %cst_12 = arith.constant 0.000000e+00 : f32
    %18 = vector.broadcast %cst_12 : f32 to vector<8x128xf32>
    %19 = arith.cmpf oge, %17, %18 : vector<8x128xf32>
    %cst_13 = arith.constant 2.000000e-01 : f32
    %20 = vector.broadcast %cst_13 : f32 to vector<8x128xf32>
    %21 = arith.mulf %20, %17 : vector<8x128xf32>
    %22 = arith.select %19, %17, %21 : vector<8x128xi1>, vector<8x128xf32>
    %23 = arith.truncf %22 : vector<8x128xf32> to vector<8x128xbf16>
    %c0_14 = arith.constant 0 : index
    %c0_15 = arith.constant 0 : index
    %24 = vector.load %arg6[%c0_14, %c0_15] : memref<128x128xbf16, #tpu.memory_space<vmem>>, vector<128x128xbf16>
    %c0_16 = arith.constant 0 : index
    %c0_17 = arith.constant 0 : index
    %25 = vector.load %arg7[%c0_16, %c0_17] : memref<1x128xf32, #tpu.memory_space<vmem>>, vector<1x128xf32>
    %cst_18 = arith.constant dense<0.000000e+00> : vector<8x128xf32>
    %26 = tpu.matmul %23, %24, %cst_18 {dimension_numbers = #tpu.dot_dimension_numbers<[1], [0], [0], [1], [0, 0, 1, 1], [], []>} : vector<8x128xbf16>, vector<128x128xbf16>, vector<8x128xf32> -> vector<8x128xf32>
    %27 = vector.broadcast %25 : vector<1x128xf32> to vector<8x128xf32>
    %28 = arith.addf %26, %27 : vector<8x128xf32>
    %29 = arith.negf %28 : vector<8x128xf32>
    %30 = math.exp %29 : vector<8x128xf32>
    %cst_19 = arith.constant 1.000000e+00 : f32
    %31 = vector.broadcast %cst_19 : f32 to vector<8x128xf32>
    %32 = arith.addf %31, %30 : vector<8x128xf32>
    %33 = arith.divf %31, %32 : vector<8x128xf32>
    %34 = arith.truncf %33 : vector<8x128xf32> to vector<8x128xbf16>
    %c0_20 = arith.constant 0 : index
    %c0_21 = arith.constant 0 : index
    %35 = vector.load %arg8[%c0_20, %c0_21] : memref<8x128xbf16, #tpu.memory_space<vmem>>, vector<8x128xbf16>
    tpu.vector_store %arg8[%c0_20, %c0_21], %34 {strides = array<i32>} : memref<8x128xbf16, #tpu.memory_space<vmem>>, vector<8x128xbf16>,
    return
  }
  func.func @transform_0(%arg0: i32) -> (i32, i32) {
    %c0_i32 = arith.constant 0 : i32
    %c0_i32_0 = arith.constant 0 : i32
    return %arg0, %c0_i32 : i32, i32
  }
  func.func @transform_1(%arg0: i32) -> (i32, i32) {
    %c0_i32 = arith.constant 0 : i32
    %c0_i32_0 = arith.constant 0 : i32
    %c0_i32_1 = arith.constant 0 : i32
    return %c0_i32, %c0_i32_0 : i32, i32
  }
  func.func @transform_2(%arg0: i32) -> (i32, i32) {
    %c0_i32 = arith.constant 0 : i32
    %c0_i32_0 = arith.constant 0 : i32
    %c0_i32_1 = arith.constant 0 : i32
    return %c0_i32, %c0_i32_0 : i32, i32
  }
  func.func @transform_3(%arg0: i32) -> (i32, i32) {
    %c0_i32 = arith.constant 0 : i32
    %c0_i32_0 = arith.constant 0 : i32
    %c0_i32_1 = arith.constant 0 : i32
    return %c0_i32, %c0_i32_0 : i32, i32
  }
  func.func @transform_4(%arg0: i32) -> (i32, i32) {
    %c0_i32 = arith.constant 0 : i32
    %c0_i32_0 = arith.constant 0 : i32
    %c0_i32_1 = arith.constant 0 : i32
    return %c0_i32, %c0_i32_0 : i32, i32
  }
  func.func @transform_5(%arg0: i32) -> (i32, i32) {
    %c0_i32 = arith.constant 0 : i32
    %c0_i32_0 = arith.constant 0 : i32
    %c0_i32_1 = arith.constant 0 : i32
    return %c0_i32, %c0_i32_0 : i32, i32
  }
  func.func @transform_6(%arg0: i32) -> (i32, i32) {
    %c0_i32 = arith.constant 0 : i32
    %c0_i32_0 = arith.constant 0 : i32
    %c0_i32_1 = arith.constant 0 : i32
    return %c0_i32, %c0_i32_0 : i32, i32
  }
  func.func @transform_7(%arg0: i32) -> (i32, i32) {
    %c0_i32 = arith.constant 0 : i32
    %c0_i32_0 = arith.constant 0 : i32
    return %arg0, %c0_i32 : i32, i32
  }
}

module attributes {stable_mosaic.version = 11 : i64} {
  func.func @_fused_mlp_disc_kernel(%arg0: i32, %arg1: memref<8x32xf32, #tpu.memory_space<vmem>>, %arg2: memref<32x128xbf16, #tpu.memory_space<vmem>>, %arg3: memref<1x128xf32, #tpu.memory_space<vmem>>, %arg4: memref<128x128xbf16, #tpu.memory_space<vmem>>, %arg5: memref<1x128xf32, #tpu.memory_space<vmem>>, %arg6: memref<128x128xbf16, #tpu.memory_space<vmem>>, %arg7: memref<1x128xf32, #tpu.memory_space<vmem>>, %arg8: memref<8x128xbf16, #tpu.memory_space<vmem>>) attributes {dimension_semantics = [#tpu.dimension_semantics<parallel>], iteration_bounds = array<i64: 1>, scalar_prefetch = 0 : i64, scratch_operands = 0 : i64, tpu.core_type = #tpu.core_type<tc>, window_params = [{transform_indices = @transform_0, window_bounds = array<i64: 8, 32>}, {pipeline_mode = #tpu.pipeline_mode<synchronous>, transform_indices = @transform_1, window_bounds = array<i64: 32, 128>}, {pipeline_mode = #tpu.pipeline_mode<synchronous>, transform_indices = @transform_2, window_bounds = array<i64: 1, 128>}, {pipeline_mode = #tpu.pipeline_mode<synchronous>, transform_indices = @transform_3, window_bounds = array<i64: 128, 128>}, {pipeline_mode = #tpu.pipeline_mode<synchronous>, transform_indices = @transform_4, window_bounds = array<i64: 1, 128>}, {pipeline_mode = #tpu.pipeline_mode<synchronous>, transform_indices = @transform_5, window_bounds = array<i64: 128, 128>}, {pipeline_mode = #tpu.pipeline_mode<synchronous>, transform_indices = @transform_6, window_bounds = array<i64: 1, 128>}, {transform_indices = @transform_7, window_bounds = array<i64: 8, 128>}]} {
    %c0 = arith.constant 0 : index
    %c0_0 = arith.constant 0 : index
    %0 = vector.load %arg1[%c0, %c0_0] : memref<8x32xf32, #tpu.memory_space<vmem>>, vector<8x32xf32>
    %1 = arith.truncf %0 : vector<8x32xf32> to vector<8x32xbf16>
    %c0_1 = arith.constant 0 : index
    %c0_2 = arith.constant 0 : index
    %2 = vector.load %arg2[%c0_1, %c0_2] : memref<32x128xbf16, #tpu.memory_space<vmem>>, vector<32x128xbf16>
    %c0_3 = arith.constant 0 : index
    %c0_4 = arith.constant 0 : index
    %3 = vector.load %arg3[%c0_3, %c0_4] : memref<1x128xf32, #tpu.memory_space<vmem>>, vector<1x128xf32>
    %cst = arith.constant dense<0.000000e+00> : vector<8x128xf32>
    %4 = tpu.matmul %1, %2, %cst {dimension_numbers = #tpu.dot_dimension_numbers<[1], [0], [0], [1], [0, 0, 1, 1], [], []>} : vector<8x32xbf16>, vector<32x128xbf16>, vector<8x128xf32> -> vector<8x128xf32>
    %5 = vector.broadcast %3 : vector<1x128xf32> to vector<8x128xf32>
    %6 = arith.addf %4, %5 : vector<8x128xf32>
    %cst_5 = arith.constant 0.000000e+00 : f32
    %7 = vector.broadcast %cst_5 : f32 to vector<8x128xf32>
    %8 = arith.cmpf oge, %6, %7 : vector<8x128xf32>
    %cst_6 = arith.constant 2.000000e-01 : f32
    %9 = vector.broadcast %cst_6 : f32 to vector<8x128xf32>
    %10 = arith.mulf %9, %6 : vector<8x128xf32>
    %11 = arith.select %8, %6, %10 : vector<8x128xi1>, vector<8x128xf32>
    %12 = arith.truncf %11 : vector<8x128xf32> to vector<8x128xbf16>
    %c0_7 = arith.constant 0 : index
    %c0_8 = arith.constant 0 : index
    %13 = vector.load %arg4[%c0_7, %c0_8] : memref<128x128xbf16, #tpu.memory_space<vmem>>, vector<128x128xbf16>
    %c0_9 = arith.constant 0 : index
    %c0_10 = arith.constant 0 : index
    %14 = vector.load %arg5[%c0_9, %c0_10] : memref<1x128xf32, #tpu.memory_space<vmem>>, vector<1x128xf32>
    %cst_11 = arith.constant dense<0.000000e+00> : vector<8x128xf32>
    %15 = tpu.matmul %12, %13, %cst_11 {dimension_numbers = #tpu.dot_dimension_numbers<[1], [0], [0], [1], [0, 0, 1, 1], [], []>} : vector<8x128xbf16>, vector<128x128xbf16>, vector<8x128xf32> -> vector<8x128xf32>
    %16 = vector.broadcast %14 : vector<1x128xf32> to vector<8x128xf32>
    %17 = arith.addf %15, %16 : vector<8x128xf32>
    %cst_12 = arith.constant 0.000000e+00 : f32
    %18 = vector.broadcast %cst_12 : f32 to vector<8x128xf32>
    %19 = arith.cmpf oge, %17, %18 : vector<8x128xf32>
    %cst_13 = arith.constant 2.000000e-01 : f32
    %20 = vector.broadcast %cst_13 : f32 to vector<8x128xf32>
    %21 = arith.mulf %20, %17 : vector<8x128xf32>
    %22 = arith.select %19, %17, %21 : vector<8x128xi1>, vector<8x128xf32>
    %23 = arith.truncf %22 : vector<8x128xf32> to vector<8x128xbf16>
    %c0_14 = arith.constant 0 : index
    %c0_15 = arith.constant 0 : index
    %24 = vector.load %arg6[%c0_14, %c0_15] : memref<128x128xbf16, #tpu.memory_space<vmem>>, vector<128x128xbf16>
    %c0_16 = arith.constant 0 : index
    %c0_17 = arith.constant 0 : index
    %25 = vector.load %arg7[%c0_16, %c0_17] : memref<1x128xf32, #tpu.memory_space<vmem>>, vector<1x128xf32>
    %cst_18 = arith.constant dense<0.000000e+00> : vector<8x128xf32>
    %26 = tpu.matmul %23, %24, %cst_18 {dimension_numbers = #tpu.dot_dimension_numbers<[1], [0], [0], [1], [0, 0, 1, 1], [], []>} : vector<8x128xbf16>, vector<128x128xbf16>, vector<8x128xf32> -> vector<8x128xf32>
    %27 = vector.broadcast %25 : vector<1x128xf32> to vector<8x128xf32>
    %28 = arith.addf %26, %27 : vector<8x128xf32>
    %29 = arith.negf %28 : vector<8x128xf32>
    %30 = math.exp %29 : vector<8x128xf32>
    %cst_19 = arith.constant 1.000000e+00 : f32
    %31 = vector.broadcast %cst_19 : f32 to vector<8x128xf32>
    %32 = arith.addf %31, %30 : vector<8x128xf32>
    %33 = arith.divf %31, %32 : vector<8x128xf32>
    %34 = arith.truncf %33 : vector<8x128xf32> to vector<8x128xbf16>
    %c0_20 = arith.constant 0 : index
    %c0_21 = arith.constant 0 : index
    %35 = vector.load %arg8[%c0_20, %c0_21] : memref<8x128xbf16, #tpu.memory_space<vmem>>, vector<8x128xbf16>
    tpu.vector_store %arg8[%c0_20, %c0_21], %34 {strides = array<i32>} : memref<8x128xbf16, #tpu.memory_space<vmem>>, vector<8x128xbf16>,
    return
  }
  func.func @transform_0(%arg0: i32) -> (i32, i32) {
    %c0_i32 = arith.constant 0 : i32
    %c0_i32_0 = arith.constant 0 : i32
    return %arg0, %c0_i32 : i32, i32
  }
  func.func @transform_1(%arg0: i32) -> (i32, i32) {
    %c0_i32 = arith.constant 0 : i32
    %c0_i32_0 = arith.constant 0 : i32
    %c0_i32_1 = arith.constant 0 : i32
    return %c0_i32, %c0_i32_0 : i32, i32
  }
  func.func @transform_2(%arg0: i32) -> (i32, i32) {
    %c0_i32 = arith.constant 0 : i32
    %c0_i32_0 = arith.constant 0 : i32
    %c0_i32_1 = arith.constant 0 : i32
    return %c0_i32, %c0_i32_0 : i32, i32
  }
  func.func @transform_3(%arg0: i32) -> (i32, i32) {
    %c0_i32 = arith.constant 0 : i32
    %c0_i32_0 = arith.constant 0 : i32
    %c0_i32_1 = arith.constant 0 : i32
    return %c0_i32, %c0_i32_0 : i32, i32
  }
  func.func @transform_4(%arg0: i32) -> (i32, i32) {
    %c0_i32 = arith.constant 0 : i32
    %c0_i32_0 = arith.constant 0 : i32
    %c0_i32_1 = arith.constant 0 : i32
    return %c0_i32, %c0_i32_0 : i32, i32
  }
  func.func @transform_5(%arg0: i32) -> (i32, i32) {
    %c0_i32 = arith.constant 0 : i32
    %c0_i32_0 = arith.constant 0 : i32
    %c0_i32_1 = arith.constant 0 : i32
    return %c0_i32, %c0_i32_0 : i32, i32
  }
  func.func @transform_6(%arg0: i32) -> (i32, i32) {
    %c0_i32 = arith.constant 0 : i32
    %c0_i32_0 = arith.constant 0 : i32
    %c0_i32_1 = arith.constant 0 : i32
    return %c0_i32, %c0_i32_0 : i32, i32
  }
  func.func @transform_7(%arg0: i32) -> (i32, i32) {
    %c0_i32 = arith.constant 0 : i32
    %c0_i32_0 = arith.constant 0 : i32
    return %arg0, %c0_i32 : i32, i32
  }
}

</mosaic_0001>

<llo_original>
// kernel: _forward_impl.1
$region0: #{_forward_impl.1}
  #allocation0 [shape = 'u32[]', space=smem, size = 0x4, offset = 0x4, fixed_abs, tag = 'smem constant byte address 0x4 - core index']
  #allocation1 [shape = 'u32[72,128]{1,0:T(1,128)}', space=vmem, size = 0x9000, scoped, tag = 'internal scratch']
  %s0 = inlined_call_operand.hbm [shape: f32[8,32], index: 0, kind: input, shape index: {}]
  %s1 = inlined_call_operand.hbm [shape: bf16[32,128], index: 1, kind: input, shape index: {}]
  %s2 = inlined_call_operand.hbm [shape: f32[1,128], index: 2, kind: input, shape index: {}]
  %s3 = inlined_call_operand.hbm [shape: bf16[128,128], index: 3, kind: input, shape index: {}]
  %s4 = inlined_call_operand.vmem [shape: f32[1,128], index: 4, kind: input, shape index: {}]
  %s5 = inlined_call_operand.hbm [shape: bf16[128,128], index: 5, kind: input, shape index: {}]
  %s6 = inlined_call_operand.vmem [shape: f32[1,128], index: 6, kind: input, shape index: {}]
  %s7 = inlined_call_operand.hbm [shape: bf16[8,128], index: 7, kind: output, shape index: {}]
  %s8 = sld [smem:[#allocation0]]
  $region58: #{_forward_impl.1} parent=0
    _
  %s10 = ssub.s32 1, %s8
  %s11 = scalar_select 0, %s10, %s8
  $region1: #{_forward_impl.1} parent=0
    #allocation2 [shape = 'u8[4096]{0}', space=vmem, size = 0x1000, scoped, tag = 'input window, operand 0, single buffered']
    #allocation3 [shape = 's32[1]{0}', space=sflag, size = 0x4, scoped, tag = 'scoped memory for _forward_impl.1']
    #allocation4 [shape = 's32[1]{0}', space=sflag, size = 0x4, scoped, tag = 'scoped memory for _forward_impl.1']
    #allocation5 [shape = 'u8[8192]{0}', space=vmem, size = 0x2000, scoped, tag = 'input window, operand 1, single buffered']
    #allocation6 [shape = 's32[1]{0}', space=sflag, size = 0x4, scoped, tag = 'scoped memory for _forward_impl.1']
    #allocation7 [shape = 'u8[512]{0}', space=vmem, size = 0x400, scoped, tag = 'input window, operand 2, single buffered']
    #allocation8 [shape = 'u8[32768]{0}', space=vmem, size = 0x8000, scoped, tag = 'input window, operand 3, single buffered']
    #allocation9 [shape = 's32[1]{0}', space=sflag, size = 0x4, scoped, tag = 'scoped memory for _forward_impl.1']
    #allocation10 [shape = 'u8[32768]{0}', space=vmem, size = 0x8000, scoped, tag = 'input window, operand 5, single buffered']
    #allocation11 [shape = 'u8[2048]{0}', space=vmem, size = 0x800, scoped, tag = 'output window, operand 0, single buffered']
    %12 = vsyncpa [#allocation3], 0
    %13 = vsyncpa [#allocation6], 0
    %14 = vsyncpa [#allocation9], 0
    %15 = vsyncpa [#allocation4], 0
    // Predicated region
    $region2: #{_forward_impl.1} parent=1 // pred_check
      _
    $region3: #{_forward_impl.1} parent=1 // pred_check_branch
      %17 = sbr.rel (0) target = $region5
    $region4: #{_forward_impl.1} parent=1 // pred_region
      %19 = vsyncadd [#allocation3], 0
      %s21 = sshll.u32 %s0, 4
      %s22 = int_to_ptr.hbm [resolvable:$true] %s21
      %s23 = sshll.u32 [#allocation2], 4
      %s24 = int_to_ptr.vmem [resolvable:$true] %s23
      %26 = dma.hbm_to_vmem [thread:$0]  %s22, 128, %s24, [#allocation3]
    $region5: #{_forward_impl.1} parent=1 // pred_fallthru
      _
    // Predicated region
    $region6: #{_forward_impl.1} parent=1 // pred_check
      _
    $region7: #{_forward_impl.1} parent=1 // pred_check_branch
      %28 = sbr.rel (0) target = $region9
    $region8: #{_forward_impl.1} parent=1 // pred_region
      %30 = vsyncadd [#allocation6], 0
      %s31 = sshll.u32 %s1, 4
      %s32 = int_to_ptr.hbm [resolvable:$true] %s31
      %s33 = sshll.u32 [#allocation5], 4
      %s34 = int_to_ptr.vmem [resolvable:$true] %s33
      %39 = dma.hbm_to_vmem [thread:$0]  %s32, 256, %s34, [#allocation6], 64, 64, 4
    $region9: #{_forward_impl.1} parent=1 // pred_fallthru
      _
    // Predicated region
    $region10: #{_forward_impl.1} parent=1 // pred_check
      _
    $region11: #{_forward_impl.1} parent=1 // pred_check_branch
      %41 = sbr.rel (0) target = $region13
    $region12: #{_forward_impl.1} parent=1 // pred_region
      %43 = vsyncadd [#allocation6], 0
      %s45 = sshll.u32 %s2, 4
      %s46 = int_to_ptr.hbm [resolvable:$true] %s45
      %s47 = sshll.u32 [#allocation7], 4
      %s48 = int_to_ptr.vmem [resolvable:$true] %s47
      %50 = dma.hbm_to_vmem [thread:$0]  %s46, 16, %s48, [#allocation6]
    $region13: #{_forward_impl.1} parent=1 // pred_fallthru
      _
    // Predicated region
    $region14: #{_forward_impl.1} parent=1 // pred_check
      _
    $region15: #{_forward_impl.1} parent=1 // pred_check_branch
      %52 = sbr.rel (0) target = $region17
    $region16: #{_forward_impl.1} parent=1 // pred_region
      %54 = vsyncadd [#allocation9], 0
      %s55 = sshll.u32 %s3, 4
      %s56 = int_to_ptr.hbm [resolvable:$true] %s55
      %s57 = sshll.u32 [#allocation8], 4
      %s58 = int_to_ptr.vmem [resolvable:$true] %s57
      %63 = dma.hbm_to_vmem [thread:$0]  %s56, 1024, %s58, [#allocation9], 64, 64, 4
    $region17: #{_forward_impl.1} parent=1 // pred_fallthru
      _
    // Predicated region
    $region18: #{_forward_impl.1} parent=1 // pred_check
      _
    $region19: #{_forward_impl.1} parent=1 // pred_check_branch
      %65 = sbr.rel (0) target = $region21
    $region20: #{_forward_impl.1} parent=1 // pred_region
      _
    $region21: #{_forward_impl.1} parent=1 // pred_fallthru
      _
    // Predicated region
    $region22: #{_forward_impl.1} parent=1 // pred_check
      _
    $region23: #{_forward_impl.1} parent=1 // pred_check_branch
      %67 = sbr.rel (0) target = $region25
    $region24: #{_forward_impl.1} parent=1 // pred_region
      %69 = vsyncadd [#allocation9], 0
      %s70 = sshll.u32 %s5, 4
      %s71 = int_to_ptr.hbm [resolvable:$true] %s70
      %s72 = sshll.u32 [#allocation10], 4
      %s73 = int_to_ptr.vmem [resolvable:$true] %s72
      %78 = dma.hbm_to_vmem [thread:$0]  %s71, 1024, %s73, [#allocation9], 64, 64, 4
    $region25: #{_forward_impl.1} parent=1 // pred_fallthru
      _
    // Predicated region
    $region26: #{_forward_impl.1} parent=1 // pred_check
      _
    $region27: #{_forward_impl.1} parent=1 // pred_check_branch
      %80 = sbr.rel (0) target = $region29
    $region28: #{_forward_impl.1} parent=1 // pred_region
      _
    $region29: #{_forward_impl.1} parent=1 // pred_fallthru
      _
    // Predicated region
    $region30: #{_forward_impl.1} parent=1 // pred_check
      _
    $region31: #{_forward_impl.1} parent=1 // pred_check_branch
      %82 = sbr.rel (0) target = $region33
    $region32: #{_forward_impl.1} parent=1 // pred_region
      %84 = dma.done [#allocation3], 128
    $region33: #{_forward_impl.1} parent=1 // pred_fallthru
      _
    // Predicated region
    $region34: #{_forward_impl.1} parent=1 // pred_check
      _
    $region35: #{_forward_impl.1} parent=1 // pred_check_branch
      %86 = sbr.rel (0) target = $region37
    $region36: #{_forward_impl.1} parent=1 // pred_region
      %88 = dma.done [#allocation6], 256
    $region37: #{_forward_impl.1} parent=1 // pred_fallthru
      _
    // Predicated region
    $region38: #{_forward_impl.1} parent=1 // pred_check
      _
    $region39: #{_forward_impl.1} parent=1 // pred_check_branch
      %90 = sbr.rel (0) target = $region41
    $region40: #{_forward_impl.1} parent=1 // pred_region
      %92 = dma.done [#allocation6], 16
    $region41: #{_forward_impl.1} parent=1 // pred_fallthru
      _
    // Predicated region
    $region42: #{_forward_impl.1} parent=1 // pred_check
      _
    $region43: #{_forward_impl.1} parent=1 // pred_check_branch
      %94 = sbr.rel (0) target = $region45
    $region44: #{_forward_impl.1} parent=1 // pred_region
      %96 = dma.done [#allocation9], 1024
    $region45: #{_forward_impl.1} parent=1 // pred_fallthru
      _
    // Predicated region
    $region46: #{_forward_impl.1} parent=1 // pred_check
      _
    $region47: #{_forward_impl.1} parent=1 // pred_check_branch
      %98 = sbr.rel (0) target = $region49
    $region48: #{_forward_impl.1} parent=1 // pred_region
      %100 = dma.done [#allocation9], 1024
    $region49: #{_forward_impl.1} parent=1 // pred_fallthru
      _
    %v102 = vld [vmem:[#allocation2] sm:$0xff]
    %v103 = vpack.c.bf16 %v102, %v102
    %v104 = vld [vmem:[#allocation5] sm:$0xf]
    %v105 = vld [vmem:[#allocation5 + $0x4] sm:$0xf]
    %v106 = vld [vmem:[#allocation5 + $0x8] sm:$0xf]
    %v107 = vld [vmem:[#allocation5 + $0xc] sm:$0xf]
    %v108 = vld [vmem:[#allocation7] sm:$0x1]
    %v110 = vperm.slane %v108, 0
    %v116 = vunpack.c.l.b16 %v104
    %v117 = vunpack.c.l.b16 %v105
    %v118 = vunpack.c.l.b16 %v106
    %v119 = vunpack.c.l.b16 %v107
    %v120 = vpack.c.b16 %v117, %v116
    %v121 = vpack.c.b16 %v119, %v118
    %vm124 = vcmask 261120
    %v126 = vsel %vm124, %v103, 0
    %128 = vmatpush.bf16.msra.mxu0 0
    %129 = vmatpush.bf16.msra.mxu0 0
    %130 = vmatpush.bf16.msra.mxu0 0
    %131 = vmatpush.bf16.msra.mxu0 0
    %132 = vmatpush.bf16.msra.mxu0 0
    %133 = vmatpush.bf16.msra.mxu0 0
    %134 = vmatpush.bf16.msra.mxu0 %v121
    %135 = vmatpush.bf16.msra.mxu0 %v120
    %136 = vmatmul.bf16.gmra.mxu0 %v126
    %v137 = vpop.f32.mrf.mxu0
    %v138 = vadd.f32 %v110, %v137
    %v139 = vpop.f32.mrf.mxu0
    %140 = vdwg.mxu0
    %vm141 = vcmp.ge.f32.partialorder %v138, 0.0
    %v142 = vmul.f32 %v138, 0.2
    %v143 = vsel %vm141, %v138, %v142
    %v144 = vpack.c.bf16 %v143, %v143
    %v145 = vld [vmem:[#allocation8] sm:$0xf]
    %v146 = vld [vmem:[#allocation8 + $0x4] sm:$0xf]
    %v147 = vld [vmem:[#allocation8 + $0x8] sm:$0xf]
    %v148 = vld [vmem:[#allocation8 + $0xc] sm:$0xf]
    %v149 = vld [vmem:[#allocation8 + $0x10] sm:$0xf]
    %v150 = vld [vmem:[#allocation8 + $0x14] sm:$0xf]
    %v151 = vld [vmem:[#allocation8 + $0x18] sm:$0xf]
    %v152 = vld [vmem:[#allocation8 + $0x1c] sm:$0xf]
    %v153 = vld [vmem:[#allocation8 + $0x20] sm:$0xf]
    %v154 = vld [vmem:[#allocation8 + $0x24] sm:$0xf]
    %v155 = vld [vmem:[#allocation8 + $0x28] sm:$0xf]
    %v156 = vld [vmem:[#allocation8 + $0x2c] sm:$0xf]
    %v157 = vld [vmem:[#allocation8 + $0x30] sm:$0xf]
    %v158 = vld [vmem:[#allocation8 + $0x34] sm:$0xf]
    %v159 = vld [vmem:[#allocation8 + $0x38] sm:$0xf]
    %v160 = vld [vmem:[#allocation8 + $0x3c] sm:$0xf]
    %v161 = vld [vmem:[%s4] sm:$0x1]
    %v163 = vperm.slane %v161, 0
    %v181 = vunpack.c.l.b16 %v145
    %v182 = vunpack.c.l.b16 %v146
    %v183 = vunpack.c.l.b16 %v147
    %v184 = vunpack.c.l.b16 %v148
    %v185 = vunpack.c.l.b16 %v149
    %v186 = vunpack.c.l.b16 %v150
    %v187 = vunpack.c.l.b16 %v151
    %v188 = vunpack.c.l.b16 %v152
    %v189 = vunpack.c.l.b16 %v153
    %v190 = vunpack.c.l.b16 %v154
    %v191 = vunpack.c.l.b16 %v155
    %v192 = vunpack.c.l.b16 %v156
    %v193 = vunpack.c.l.b16 %v157
    %v194 = vunpack.c.l.b16 %v158
    %v195 = vunpack.c.l.b16 %v159
    %v196 = vunpack.c.l.b16 %v160
    %v197 = vpack.c.b16 %v182, %v181
    %v198 = vpack.c.b16 %v184, %v183
    %v199 = vpack.c.b16 %v186, %v185
    %v200 = vpack.c.b16 %v188, %v187
    %v201 = vpack.c.b16 %v190, %v189
    %v202 = vpack.c.b16 %v192, %v191
    %v203 = vpack.c.b16 %v194, %v193
    %v204 = vpack.c.b16 %v196, %v195
    %213 = vmatpush.bf16.msra.mxu0 %v204
    %214 = vmatpush.bf16.msra.mxu0 %v203
    %215 = vmatpush.bf16.msra.mxu0 %v202
    %216 = vmatpush.bf16.msra.mxu0 %v201
    %217 = vmatpush.bf16.msra.mxu0 %v200
    %218 = vmatpush.bf16.msra.mxu0 %v199
    %219 = vmatpush.bf16.msra.mxu0 %v198
    %220 = vmatpush.bf16.msra.mxu0 %v197
    %221 = vmatmul.bf16.gmra.mxu0 %v144
    %v222 = vpop.f32.mrf.mxu0
    %v223 = vadd.f32 %v163, %v222
    %v224 = vpop.f32.mrf.mxu0
    %225 = vdwg.mxu0
    %vm226 = vcmp.ge.f32.partialorder %v223, 0.0
    %v227 = vmul.f32 %v223, 0.2
    %v228 = vsel %vm226, %v223, %v227
    %v229 = vpack.c.bf16 %v228, %v228
    %v230 = vld [vmem:[#allocation10] sm:$0xf]
    %v231 = vld [vmem:[#allocation10 + $0x4] sm:$0xf]
    %v232 = vld [vmem:[#allocation10 + $0x8] sm:$0xf]
    %v233 = vld [vmem:[#allocation10 + $0xc] sm:$0xf]
    %v234 = vld [vmem:[#allocation10 + $0x10] sm:$0xf]
    %v235 = vld [vmem:[#allocation10 + $0x14] sm:$0xf]
    %v236 = vld [vmem:[#allocation10 + $0x18] sm:$0xf]
    %v237 = vld [vmem:[#allocation10 + $0x1c] sm:$0xf]
    %v238 = vld [vmem:[#allocation10 + $0x20] sm:$0xf]
    %v239 = vld [vmem:[#allocation10 + $0x24] sm:$0xf]
    %v240 = vld [vmem:[#allocation10 + $0x28] sm:$0xf]
    %v241 = vld [vmem:[#allocation10 + $0x2c] sm:$0xf]
    %v242 = vld [vmem:[#allocation10 + $0x30] sm:$0xf]
    %v243 = vld [vmem:[#allocation10 + $0x34] sm:$0xf]
    %v244 = vld [vmem:[#allocation10 + $0x38] sm:$0xf]
    %v245 = vld [vmem:[#allocation10 + $0x3c] sm:$0xf]
    %v246 = vld [vmem:[%s6] sm:$0x1]
    %v248 = vperm.slane %v246, 0
    %v266 = vunpack.c.l.b16 %v230
    %v267 = vunpack.c.l.b16 %v231
    %v268 = vunpack.c.l.b16 %v232
    %v269 = vunpack.c.l.b16 %v233
    %v270 = vunpack.c.l.b16 %v234
    %v271 = vunpack.c.l.b16 %v235
    %v272 = vunpack.c.l.b16 %v236
    %v273 = vunpack.c.l.b16 %v237
    %v274 = vunpack.c.l.b16 %v238
    %v275 = vunpack.c.l.b16 %v239
    %v276 = vunpack.c.l.b16 %v240
    %v277 = vunpack.c.l.b16 %v241
    %v278 = vunpack.c.l.b16 %v242
    %v279 = vunpack.c.l.b16 %v243
    %v280 = vunpack.c.l.b16 %v244
    %v281 = vunpack.c.l.b16 %v245
    %v282 = vpack.c.b16 %v267, %v266
    %v283 = vpack.c.b16 %v269, %v268
    %v284 = vpack.c.b16 %v271, %v270
    %v285 = vpack.c.b16 %v273, %v272
    %v286 = vpack.c.b16 %v275, %v274
    %v287 = vpack.c.b16 %v277, %v276
    %v288 = vpack.c.b16 %v279, %v278
    %v289 = vpack.c.b16 %v281, %v280
    %298 = vmatpush.bf16.msra.mxu0 %v289
    %299 = vmatpush.bf16.msra.mxu0 %v288
    %300 = vmatpush.bf16.msra.mxu0 %v287
    %301 = vmatpush.bf16.msra.mxu0 %v286
    %302 = vmatpush.bf16.msra.mxu0 %v285
    %303 = vmatpush.bf16.msra.mxu0 %v284
    %304 = vmatpush.bf16.msra.mxu0 %v283
    %305 = vmatpush.bf16.msra.mxu0 %v282
    %306 = vmatmul.bf16.gmra.mxu0 %v229
    %v307 = vpop.f32.mrf.mxu0
    %v308 = vadd.f32 %v248, %v307
    %v309 = vpop.f32.mrf.mxu0
    %310 = vdwg.mxu0
    %v311 = vxor.u32 %v308, 2147483648
    %v312 = vmul.f32 %v311, 1.442695
    %v313 = vpow.pop %v312
    %v314 = vadd.f32 %v313, 1.0
    %v315 = vrcp.pop %v314
    %v316 = vmul.f32 %v314, %v315
    %v317 = vsub.f32 1.0, %v316
    %v318 = vmul.f32 %v315, %v317
    %v319 = vadd.f32 %v315, %v318
    %vm320 = vweird.f32 %v314
    %vm321 = vweird.f32 %v315
    %vm322 = vmor %vm320, %vm321
    %v323 = vsel %vm322, %v315, %v319
    %v324 = vand.u32 2147483647, %v314
    %vm325 = vcmp.eq.f32.partialorder %v324, 8.507059e+37
    %v326 = vand.u32 %v314, 2147483648
    %v327 = vor.u32 1.1754944e-38, %v326
    %v328 = vsel %vm325, %v327, %v323
    %v329 = vmul.f32 1.0, %v328
    %v330 = vpack.c.bf16 %v329, %v329
    %331 = vst [vmem:[#allocation11] sm:$0xf] %v330
    // Predicated region
    $region50: #{_forward_impl.1} parent=1 // pred_check
      _
    $region51: #{_forward_impl.1} parent=1 // pred_check_branch
      %333 = sbr.rel (0) target = $region53
    $region52: #{_forward_impl.1} parent=1 // pred_region
      %335 = vsyncadd [#allocation4], 0
      %s337 = sshll.u32 [#allocation11], 4
      %s338 = int_to_ptr.vmem [resolvable:$true] %s337
      %s339 = sshll.u32 %s7, 4
      %s340 = int_to_ptr.hbm [resolvable:$true] %s339
      %342 = dma.vmem_to_hbm [thread:$0]  %s338, 64, %s340, [#allocation4]
    $region53: #{_forward_impl.1} parent=1 // pred_fallthru
      _
    // Predicated region
    $region54: #{_forward_impl.1} parent=1 // pred_check
      _
    $region55: #{_forward_impl.1} parent=1 // pred_check_branch
      %344 = sbr.rel (0) target = $region57
    $region56: #{_forward_impl.1} parent=1 // pred_region
      %346 = dma.done [#allocation4], 64
    $region57: #{_forward_impl.1} parent=1 // pred_fallthru
      _
    %347 = vsyncpa [#allocation3], 1
    %348 = vsyncpa [#allocation6], 1
    %349 = vsyncpa [#allocation9], 1
    %350 = vsyncpa [#allocation4], 1

// kernel: _forward_impl.1
$region0: #{_forward_impl.1}
  #allocation0 [shape = 'u32[]', space=smem, size = 0x4, offset = 0x4, fixed_abs, tag = 'smem constant byte address 0x4 - core index']
  #allocation1 [shape = 'u32[72,128]{1,0:T(1,128)}', space=vmem, size = 0x9000, scoped, tag = 'internal scratch']
  %s0 = inlined_call_operand.hbm [shape: f32[8,32], index: 0, kind: input, shape index: {}]
  %s1 = inlined_call_operand.hbm [shape: bf16[32,128], index: 1, kind: input, shape index: {}]
  %s2 = inlined_call_operand.hbm [shape: f32[1,128], index: 2, kind: input, shape index: {}]
  %s3 = inlined_call_operand.hbm [shape: bf16[128,128], index: 3, kind: input, shape index: {}]
  %s4 = inlined_call_operand.vmem [shape: f32[1,128], index: 4, kind: input, shape index: {}]
  %s5 = inlined_call_operand.hbm [shape: bf16[128,128], index: 5, kind: input, shape index: {}]
  %s6 = inlined_call_operand.vmem [shape: f32[1,128], index: 6, kind: input, shape index: {}]
  %s7 = inlined_call_operand.hbm [shape: bf16[8,128], index: 7, kind: output, shape index: {}]
  %s8 = sld [smem:[#allocation0]]
  $region58: #{_forward_impl.1} parent=0
    _
  %s10 = ssub.s32 1, %s8
  %s11 = scalar_select 0, %s10, %s8
  $region1: #{_forward_impl.1} parent=0
    #allocation2 [shape = 'u8[4096]{0}', space=vmem, size = 0x1000, scoped, tag = 'input window, operand 0, single buffered']
    #allocation3 [shape = 's32[1]{0}', space=sflag, size = 0x4, scoped, tag = 'scoped memory for _forward_impl.1']
    #allocation4 [shape = 's32[1]{0}', space=sflag, size = 0x4, scoped, tag = 'scoped memory for _forward_impl.1']
    #allocation5 [shape = 'u8[8192]{0}', space=vmem, size = 0x2000, scoped, tag = 'input window, operand 1, single buffered']
    #allocation6 [shape = 's32[1]{0}', space=sflag, size = 0x4, scoped, tag = 'scoped memory for _forward_impl.1']
    #allocation7 [shape = 'u8[512]{0}', space=vmem, size = 0x400, scoped, tag = 'input window, operand 2, single buffered']
    #allocation8 [shape = 'u8[32768]{0}', space=vmem, size = 0x8000, scoped, tag = 'input window, operand 3, single buffered']
    #allocation9 [shape = 's32[1]{0}', space=sflag, size = 0x4, scoped, tag = 'scoped memory for _forward_impl.1']
    #allocation10 [shape = 'u8[32768]{0}', space=vmem, size = 0x8000, scoped, tag = 'input window, operand 5, single buffered']
    #allocation11 [shape = 'u8[2048]{0}', space=vmem, size = 0x800, scoped, tag = 'output window, operand 0, single buffered']
    %12 = vsyncpa [#allocation3], 0
    %13 = vsyncpa [#allocation6], 0
    %14 = vsyncpa [#allocation9], 0
    %15 = vsyncpa [#allocation4], 0
    // Predicated region
    $region2: #{_forward_impl.1} parent=1 // pred_check
      _
    $region3: #{_forward_impl.1} parent=1 // pred_check_branch
      %17 = sbr.rel (0) target = $region5
    $region4: #{_forward_impl.1} parent=1 // pred_region
      %19 = vsyncadd [#allocation3], 0
      %s21 = sshll.u32 %s0, 4
      %s22 = int_to_ptr.hbm [resolvable:$true] %s21
      %s23 = sshll.u32 [#allocation2], 4
      %s24 = int_to_ptr.vmem [resolvable:$true] %s23
      %26 = dma.hbm_to_vmem [thread:$0]  %s22, 128, %s24, [#allocation3]
    $region5: #{_forward_impl.1} parent=1 // pred_fallthru
      _
    // Predicated region
    $region6: #{_forward_impl.1} parent=1 // pred_check
      _
    $region7: #{_forward_impl.1} parent=1 // pred_check_branch
      %28 = sbr.rel (0) target = $region9
    $region8: #{_forward_impl.1} parent=1 // pred_region
      %30 = vsyncadd [#allocation6], 0
      %s31 = sshll.u32 %s1, 4
      %s32 = int_to_ptr.hbm [resolvable:$true] %s31
      %s33 = sshll.u32 [#allocation5], 4
      %s34 = int_to_ptr.vmem [resolvable:$true] %s33
      %39 = dma.hbm_to_vmem [thread:$0]  %s32, 256, %s34, [#allocation6], 64, 64, 4
    $region9: #{_forward_impl.1} parent=1 // pred_fallthru
      _
    // Predicated region
    $region10: #{_forward_impl.1} parent=1 // pred_check
      _
    $region11: #{_forward_impl.1} parent=1 // pred_check_branch
      %41 = sbr.rel (0) target = $region13
    $region12: #{_forward_impl.1} parent=1 // pred_region
      %43 = vsyncadd [#allocation6], 0
      %s45 = sshll.u32 %s2, 4
      %s46 = int_to_ptr.hbm [resolvable:$true] %s45
      %s47 = sshll.u32 [#allocation7], 4
      %s48 = int_to_ptr.vmem [resolvable:$true] %s47
      %50 = dma.hbm_to_vmem [thread:$0]  %s46, 16, %s48, [#allocation6]
    $region13: #{_forward_impl.1} parent=1 // pred_fallthru
      _
    // Predicated region
    $region14: #{_forward_impl.1} parent=1 // pred_check
      _
    $region15: #{_forward_impl.1} parent=1 // pred_check_branch
      %52 = sbr.rel (0) target = $region17
    $region16: #{_forward_impl.1} parent=1 // pred_region
      %54 = vsyncadd [#allocation9], 0
      %s55 = sshll.u32 %s3, 4
      %s56 = int_to_ptr.hbm [resolvable:$true] %s55
      %s57 = sshll.u32 [#allocation8], 4
      %s58 = int_to_ptr.vmem [resolvable:$true] %s57
      %63 = dma.hbm_to_vmem [thread:$0]  %s56, 1024, %s58, [#allocation9], 64, 64, 4
    $region17: #{_forward_impl.1} parent=1 // pred_fallthru
      _
    // Predicated region
    $region18: #{_forward_impl.1} parent=1 // pred_check
      _
    $region19: #{_forward_impl.1} parent=1 // pred_check_branch
      %65 = sbr.rel (0) target = $region21
    $region20: #{_forward_impl.1} parent=1 // pred_region
      _
    $region21: #{_forward_impl.1} parent=1 // pred_fallthru
      _
    // Predicated region
    $region22: #{_forward_impl.1} parent=1 // pred_check
      _
    $region23: #{_forward_impl.1} parent=1 // pred_check_branch
      %67 = sbr.rel (0) target = $region25
    $region24: #{_forward_impl.1} parent=1 // pred_region
      %69 = vsyncadd [#allocation9], 0
      %s70 = sshll.u32 %s5, 4
      %s71 = int_to_ptr.hbm [resolvable:$true] %s70
      %s72 = sshll.u32 [#allocation10], 4
      %s73 = int_to_ptr.vmem [resolvable:$true] %s72
      %78 = dma.hbm_to_vmem [thread:$0]  %s71, 1024, %s73, [#allocation9], 64, 64, 4
    $region25: #{_forward_impl.1} parent=1 // pred_fallthru
      _
    // Predicated region
    $region26: #{_forward_impl.1} parent=1 // pred_check
      _
    $region27: #{_forward_impl.1} parent=1 // pred_check_branch
      %80 = sbr.rel (0) target = $region29
    $region28: #{_forward_impl.1} parent=1 // pred_region
      _
    $region29: #{_forward_impl.1} parent=1 // pred_fallthru
      _
    // Predicated region
    $region30: #{_forward_impl.1} parent=1 // pred_check
      _
    $region31: #{_forward_impl.1} parent=1 // pred_check_branch
      %82 = sbr.rel (0) target = $region33
    $region32: #{_forward_impl.1} parent=1 // pred_region
      %84 = dma.done [#allocation3], 128
    $region33: #{_forward_impl.1} parent=1 // pred_fallthru
      _
    // Predicated region
    $region34: #{_forward_impl.1} parent=1 // pred_check
      _
    $region35: #{_forward_impl.1} parent=1 // pred_check_branch
      %86 = sbr.rel (0) target = $region37
    $region36: #{_forward_impl.1} parent=1 // pred_region
      %88 = dma.done [#allocation6], 256
    $region37: #{_forward_impl.1} parent=1 // pred_fallthru
      _
    // Predicated region
    $region38: #{_forward_impl.1} parent=1 // pred_check
      _
    $region39: #{_forward_impl.1} parent=1 // pred_check_branch
      %90 = sbr.rel (0) target = $region41
    $region40: #{_forward_impl.1} parent=1 // pred_region
      %92 = dma.done [#allocation6], 16
    $region41: #{_forward_impl.1} parent=1 // pred_fallthru
      _
    // Predicated region
    $region42: #{_forward_impl.1} parent=1 // pred_check
      _
    $region43: #{_forward_impl.1} parent=1 // pred_check_branch
      %94 = sbr.rel (0) target = $region45
    $region44: #{_forward_impl.1} parent=1 // pred_region
      %96 = dma.done [#allocation9], 1024
    $region45: #{_forward_impl.1} parent=1 // pred_fallthru
      _
    // Predicated region
    $region46: #{_forward_impl.1} parent=1 // pred_check
      _
    $region47: #{_forward_impl.1} parent=1 // pred_check_branch
      %98 = sbr.rel (0) target = $region49
    $region48: #{_forward_impl.1} parent=1 // pred_region
      %100 = dma.done [#allocation9], 1024
    $region49: #{_forward_impl.1} parent=1 // pred_fallthru
      _
    %v102 = vld [vmem:[#allocation2] sm:$0xff]
    %v103 = vpack.c.bf16 %v102, %v102
    %v104 = vld [vmem:[#allocation5] sm:$0xf]
    %v105 = vld [vmem:[#allocation5 + $0x4] sm:$0xf]
    %v106 = vld [vmem:[#allocation5 + $0x8] sm:$0xf]
    %v107 = vld [vmem:[#allocation5 + $0xc] sm:$0xf]
    %v108 = vld [vmem:[#allocation7] sm:$0x1]
    %v110 = vperm.slane %v108, 0
    %v116 = vunpack.c.l.b16 %v104
    %v117 = vunpack.c.l.b16 %v105
    %v118 = vunpack.c.l.b16 %v106
    %v119 = vunpack.c.l.b16 %v107
    %v120 = vpack.c.b16 %v117, %v116
    %v121 = vpack.c.b16 %v119, %v118
    %vm124 = vcmask 261120
    %v126 = vsel %vm124, %v103, 0
    %128 = vmatpush.bf16.msra.mxu0 0
    %129 = vmatpush.bf16.msra.mxu0 0
    %130 = vmatpush.bf16.msra.mxu0 0
    %131 = vmatpush.bf16.msra.mxu0 0
    %132 = vmatpush.bf16.msra.mxu0 0
    %133 = vmatpush.bf16.msra.mxu0 0
    %134 = vmatpush.bf16.msra.mxu0 %v121
    %135 = vmatpush.bf16.msra.mxu0 %v120
    %136 = vmatmul.bf16.gmra.mxu0 %v126
    %v137 = vpop.f32.mrf.mxu0
    %v138 = vadd.f32 %v110, %v137
    %v139 = vpop.f32.mrf.mxu0
    %140 = vdwg.mxu0
    %vm141 = vcmp.ge.f32.partialorder %v138, 0.0
    %v142 = vmul.f32 %v138, 0.2
    %v143 = vsel %vm141, %v138, %v142
    %v144 = vpack.c.bf16 %v143, %v143
    %v145 = vld [vmem:[#allocation8] sm:$0xf]
    %v146 = vld [vmem:[#allocation8 + $0x4] sm:$0xf]
    %v147 = vld [vmem:[#allocation8 + $0x8] sm:$0xf]
    %v148 = vld [vmem:[#allocation8 + $0xc] sm:$0xf]
    %v149 = vld [vmem:[#allocation8 + $0x10] sm:$0xf]
    %v150 = vld [vmem:[#allocation8 + $0x14] sm:$0xf]
    %v151 = vld [vmem:[#allocation8 + $0x18] sm:$0xf]
    %v152 = vld [vmem:[#allocation8 + $0x1c] sm:$0xf]
    %v153 = vld [vmem:[#allocation8 + $0x20] sm:$0xf]
    %v154 = vld [vmem:[#allocation8 + $0x24] sm:$0xf]
    %v155 = vld [vmem:[#allocation8 + $0x28] sm:$0xf]
    %v156 = vld [vmem:[#allocation8 + $0x2c] sm:$0xf]
    %v157 = vld [vmem:[#allocation8 + $0x30] sm:$0xf]
    %v158 = vld [vmem:[#allocation8 + $0x34] sm:$0xf]
    %v159 = vld [vmem:[#allocation8 + $0x38] sm:$0xf]
    %v160 = vld [vmem:[#allocation8 + $0x3c] sm:$0xf]
    %v161 = vld [vmem:[%s4] sm:$0x1]
    %v163 = vperm.slane %v161, 0
    %v181 = vunpack.c.l.b16 %v145
    %v182 = vunpack.c.l.b16 %v146
    %v183 = vunpack.c.l.b16 %v147
    %v184 = vunpack.c.l.b16 %v148
    %v185 = vunpack.c.l.b16 %v149
    %v186 = vunpack.c.l.b16 %v150
    %v187 = vunpack.c.l.b16 %v151
    %v188 = vunpack.c.l.b16 %v152
    %v189 = vunpack.c.l.b16 %v153
    %v190 = vunpack.c.l.b16 %v154
    %v191 = vunpack.c.l.b16 %v155
    %v192 = vunpack.c.l.b16 %v156
    %v193 = vunpack.c.l.b16 %v157
    %v194 = vunpack.c.l.b16 %v158
    %v195 = vunpack.c.l.b16 %v159
    %v196 = vunpack.c.l.b16 %v160
    %v197 = vpack.c.b16 %v182, %v181
    %v198 = vpack.c.b16 %v184, %v183
    %v199 = vpack.c.b16 %v186, %v185
    %v200 = vpack.c.b16 %v188, %v187
    %v201 = vpack.c.b16 %v190, %v189
    %v202 = vpack.c.b16 %v192, %v191
    %v203 = vpack.c.b16 %v194, %v193
    %v204 = vpack.c.b16 %v196, %v195
    %213 = vmatpush.bf16.msra.mxu0 %v204
    %214 = vmatpush.bf16.msra.mxu0 %v203
    %215 = vmatpush.bf16.msra.mxu0 %v202
    %216 = vmatpush.bf16.msra.mxu0 %v201
    %217 = vmatpush.bf16.msra.mxu0 %v200
    %218 = vmatpush.bf16.msra.mxu0 %v199
    %219 = vmatpush.bf16.msra.mxu0 %v198
    %220 = vmatpush.bf16.msra.mxu0 %v197
    %221 = vmatmul.bf16.gmra.mxu0 %v144
    %v222 = vpop.f32.mrf.mxu0
    %v223 = vadd.f32 %v163, %v222
    %v224 = vpop.f32.mrf.mxu0
    %225 = vdwg.mxu0
    %vm226 = vcmp.ge.f32.partialorder %v223, 0.0
    %v227 = vmul.f32 %v223, 0.2
    %v228 = vsel %vm226, %v223, %v227
    %v229 = vpack.c.bf16 %v228, %v228
    %v230 = vld [vmem:[#allocation10] sm:$0xf]
    %v231 = vld [vmem:[#allocation10 + $0x4] sm:$0xf]
    %v232 = vld [vmem:[#allocation10 + $0x8] sm:$0xf]
    %v233 = vld [vmem:[#allocation10 + $0xc] sm:$0xf]
    %v234 = vld [vmem:[#allocation10 + $0x10] sm:$0xf]
    %v235 = vld [vmem:[#allocation10 + $0x14] sm:$0xf]
    %v236 = vld [vmem:[#allocation10 + $0x18] sm:$0xf]
    %v237 = vld [vmem:[#allocation10 + $0x1c] sm:$0xf]
    %v238 = vld [vmem:[#allocation10 + $0x20] sm:$0xf]
    %v239 = vld [vmem:[#allocation10 + $0x24] sm:$0xf]
    %v240 = vld [vmem:[#allocation10 + $0x28] sm:$0xf]
    %v241 = vld [vmem:[#allocation10 + $0x2c] sm:$0xf]
    %v242 = vld [vmem:[#allocation10 + $0x30] sm:$0xf]
    %v243 = vld [vmem:[#allocation10 + $0x34] sm:$0xf]
    %v244 = vld [vmem:[#allocation10 + $0x38] sm:$0xf]
    %v245 = vld [vmem:[#allocation10 + $0x3c] sm:$0xf]
    %v246 = vld [vmem:[%s6] sm:$0x1]
    %v248 = vperm.slane %v246, 0
    %v266 = vunpack.c.l.b16 %v230
    %v267 = vunpack.c.l.b16 %v231
    %v268 = vunpack.c.l.b16 %v232
    %v269 = vunpack.c.l.b16 %v233
    %v270 = vunpack.c.l.b16 %v234
    %v271 = vunpack.c.l.b16 %v235
    %v272 = vunpack.c.l.b16 %v236
    %v273 = vunpack.c.l.b16 %v237
    %v274 = vunpack.c.l.b16 %v238
    %v275 = vunpack.c.l.b16 %v239
    %v276 = vunpack.c.l.b16 %v240
    %v277 = vunpack.c.l.b16 %v241
    %v278 = vunpack.c.l.b16 %v242
    %v279 = vunpack.c.l.b16 %v243
    %v280 = vunpack.c.l.b16 %v244
    %v281 = vunpack.c.l.b16 %v245
    %v282 = vpack.c.b16 %v267, %v266
    %v283 = vpack.c.b16 %v269, %v268
    %v284 = vpack.c.b16 %v271, %v270
    %v285 = vpack.c.b16 %v273, %v272
    %v286 = vpack.c.b16 %v275, %v274
    %v287 = vpack.c.b16 %v277, %v276
    %v288 = vpack.c.b16 %v279, %v278
    %v289 = vpack.c.b16 %v281, %v280
    %298 = vmatpush.bf16.msra.mxu0 %v289
    %299 = vmatpush.bf16.msra.mxu0 %v288
    %300 = vmatpush.bf16.msra.mxu0 %v287
    %301 = vmatpush.bf16.msra.mxu0 %v286
    %302 = vmatpush.bf16.msra.mxu0 %v285
    %303 = vmatpush.bf16.msra.mxu0 %v284
    %304 = vmatpush.bf16.msra.mxu0 %v283
    %305 = vmatpush.bf16.msra.mxu0 %v282
    %306 = vmatmul.bf16.gmra.mxu0 %v229
    %v307 = vpop.f32.mrf.mxu0
    %v308 = vadd.f32 %v248, %v307
    %v309 = vpop.f32.mrf.mxu0
    %310 = vdwg.mxu0
    %v311 = vxor.u32 %v308, 2147483648
    %v312 = vmul.f32 %v311, 1.442695
    %v313 = vpow.pop %v312
    %v314 = vadd.f32 %v313, 1.0
    %v315 = vrcp.pop %v314
    %v316 = vmul.f32 %v314, %v315
    %v317 = vsub.f32 1.0, %v316
    %v318 = vmul.f32 %v315, %v317
    %v319 = vadd.f32 %v315, %v318
    %vm320 = vweird.f32 %v314
    %vm321 = vweird.f32 %v315
    %vm322 = vmor %vm320, %vm321
    %v323 = vsel %vm322, %v315, %v319
    %v324 = vand.u32 2147483647, %v314
    %vm325 = vcmp.eq.f32.partialorder %v324, 8.507059e+37
    %v326 = vand.u32 %v314, 2147483648
    %v327 = vor.u32 1.1754944e-38, %v326
    %v328 = vsel %vm325, %v327, %v323
    %v329 = vmul.f32 1.0, %v328
    %v330 = vpack.c.bf16 %v329, %v329
    %331 = vst [vmem:[#allocation11] sm:$0xf] %v330
    // Predicated region
    $region50: #{_forward_impl.1} parent=1 // pred_check
      _
    $region51: #{_forward_impl.1} parent=1 // pred_check_branch
      %333 = sbr.rel (0) target = $region53
    $region52: #{_forward_impl.1} parent=1 // pred_region
      %335 = vsyncadd [#allocation4], 0
      %s337 = sshll.u32 [#allocation11], 4
      %s338 = int_to_ptr.vmem [resolvable:$true] %s337
      %s339 = sshll.u32 %s7, 4
      %s340 = int_to_ptr.hbm [resolvable:$true] %s339
      %342 = dma.vmem_to_hbm [thread:$0]  %s338, 64, %s340, [#allocation4]
    $region53: #{_forward_impl.1} parent=1 // pred_fallthru
      _
    // Predicated region
    $region54: #{_forward_impl.1} parent=1 // pred_check
      _
    $region55: #{_forward_impl.1} parent=1 // pred_check_branch
      %344 = sbr.rel (0) target = $region57
    $region56: #{_forward_impl.1} parent=1 // pred_region
      %346 = dma.done [#allocation4], 64
    $region57: #{_forward_impl.1} parent=1 // pred_fallthru
      _
    %347 = vsyncpa [#allocation3], 1
    %348 = vsyncpa [#allocation6], 1
    %349 = vsyncpa [#allocation9], 1
    %350 = vsyncpa [#allocation4], 1

</llo_original>
